<compile_context>
chip_gen: v6e
topology: v6e:2x2x1
jax: 0.10.0
libtpu: 0.0.40
codegen_flags: <defaults>
</compile_context>

<pallas_src>
import functools

import jax
import jax.numpy as jnp
from jax import lax
from jax.experimental import pallas as pl
from jax.experimental.pallas import tpu as pltpu

_VMEM_LIMIT = 48 * 1024 * 1024  # fits v7x (64 MiB) and is plenty for v5e/v6e.


def _round_up(x, m):
    return ((x + m - 1) // m) * m


# ----------------------------------------------------------------------------
# Tile-size helpers
# ----------------------------------------------------------------------------
def _pick_row_tile(r, din, dout, budget=36 * 1024 * 1024):
    """Largest row tile whose double-buffered footprint fits `budget`."""
    w_bytes = 2 * din * dout * 2  # bf16 weight, assume 2 buffers (conservative)
    for tr in (1024, 512, 256, 128):
        foot = w_bytes + 2 * tr * din * 2 + 2 * tr * dout * 4
        if foot <= budget:
            return min(tr, r)
    return min(128, r)


def _pick_q_tile(n):
    return n if n <= 512 else 512


def _kv_tiling(m):
    """Return (tk, padded_M). KV is padded to a multiple of tk (>=128 lanes)."""
    if m >= 1024:
        tk = 1024
    else:
        tk = min(1024, _round_up(m, 128))
    return tk, _round_up(m, tk)


def _pick_head_group(heads, d, tq, tk, budget=32 * 1024 * 1024):
    """Largest G dividing `heads` whose footprint fits `budget`.

    Lane density: require (G*d) % 128 == 0 unless G == heads (full last dim)."""
    valid = [g for g in range(1, heads + 1)
             if heads % g == 0 and (g == heads or (g * d) % 128 == 0)]
    best = valid[0]
    for g in valid:
        gd = g * d
        blocks = 2 * 2 * gd * (2 * tq + 2 * tk)   # q+out (tq), k+v (tk), bf16, 2 buffers
        scratch = g * tq * (d + 2) * 4            # fp32 acc + m + l
        temps = 2 * tq * tk * 4                   # fp32 score tile + exp temp
        if blocks + scratch + temps <= budget:
            best = g
    return best


# ----------------------------------------------------------------------------
# Kernel 1: row-tiled linear projection (bf16 MXU inputs, fp32 accumulation)
# ----------------------------------------------------------------------------
def _linear_kernel(x_ref, w_ref, o_ref):
    x = x_ref[...].astype(jnp.bfloat16)
    o_ref[...] = jnp.dot(x, w_ref[...],
                         preferred_element_type=jnp.float32).astype(o_ref.dtype)


def _linear_bias_kernel(x_ref, w_ref, b_ref, o_ref):
    x = x_ref[...].astype(jnp.bfloat16)
    acc = jnp.dot(x, w_ref[...], preferred_element_type=jnp.float32)
    o_ref[...] = (acc + b_ref[...].astype(jnp.float32)).astype(o_ref.dtype)


def _tiled_linear(x2d, w_t, bias=None, *, out_dtype):
    """y = x2d @ w_t (+ bias). Rows tiled; weight stays VMEM-resident."""
    R, Din = x2d.shape
    Dout = w_t.shape[1]
    tr = _pick_row_tile(R, Din, Dout)
    grid = (pl.cdiv(R, tr),)

    in_specs = [
        pl.BlockSpec((tr, Din), lambda i: (i, 0)),
        pl.BlockSpec((Din, Dout), lambda i: (0, 0)),
    ]
    args = [x2d, w_t]
    if bias is None:
        kernel = _linear_kernel
    else:
        kernel = _linear_bias_kernel
        in_specs.append(pl.BlockSpec((1, Dout), lambda i: (0, 0)))
        args.append(bias)

    return pl.pallas_call(
        kernel,
        out_shape=jax.ShapeDtypeStruct((R, Dout), out_dtype),
        grid_spec=pltpu.PrefetchScalarGridSpec(
            num_scalar_prefetch=0,
            grid=grid,
            in_specs=in_specs,
            out_specs=pl.BlockSpec((tr, Dout), lambda i: (i, 0)),
        ),
        compiler_params=pltpu.CompilerParams(
            dimension_semantics=("parallel",),
            vmem_limit_bytes=_VMEM_LIMIT),
    )(*args)


# ----------------------------------------------------------------------------
# Kernel 2: flash attention over packed head groups
# ----------------------------------------------------------------------------
def _flash_attn_kernel(q_ref, k_ref, v_ref, o_ref, m_sc, l_sc, acc_sc, *,
                       g_heads, d, tk, kv_len, needs_mask):
    ki = pl.program_id(3)

    @pl.when(ki == 0)
    def _():
        m_sc[...] = jnp.full_like(m_sc, -jnp.inf)
        l_sc[...] = jnp.zeros_like(l_sc)
        acc_sc[...] = jnp.zeros_like(acc_sc)

    if needs_mask:
        # Column index within the full (padded) KV axis; padded tail masked.
        col = lax.broadcasted_iota(jnp.int32, (1, tk), 1) + ki * tk
        keep = col < kv_len

    # Static unroll over the heads packed in this block; per-head operands are
    # sliced directly from the refs so only one head's tiles are live at once.
    for h in range(g_heads):
        qh = q_ref[0, :, h * d:(h + 1) * d]   # (tq, d) bf16 (scale folded in Wq)
        kh = k_ref[0, :, h * d:(h + 1) * d]   # (tk, d) bf16
        vh = v_ref[0, :, h * d:(h + 1) * d]   # (tk, d) bf16

        # sim = q @ k^T with fp32 accumulation; contract last dims so no
        # explicit transpose of the K tile is materialized.
        s = lax.dot_general(qh, kh, (((1,), (1,)), ((), ())),
                            preferred_element_type=jnp.float32)  # (tq, tk)
        if needs_mask:
            s = jnp.where(keep, s, -3.0e38)

        m_prev = m_sc[h]                                          # (tq, 1)
        m_new = jnp.maximum(m_prev, jnp.max(s, axis=-1, keepdims=True))
        alpha = jnp.exp(m_prev - m_new)
        p = jnp.exp(s - m_new)
        l_sc[h] = alpha * l_sc[h] + jnp.sum(p, axis=-1, keepdims=True)
        acc_sc[h] = alpha * acc_sc[h] + jnp.dot(
            p.astype(vh.dtype), vh, preferred_element_type=jnp.float32)
        m_sc[h] = m_new

    @pl.when(ki == pl.num_programs(3) - 1)
    def _():
        # Single lane-dense (tq, G*d) store instead of G narrow masked stores.
        outs = []
        for h in range(g_heads):
            inv_l = pl.reciprocal(l_sc[h], approx=True)
            outs.append((acc_sc[h] * inv_l).astype(o_ref.dtype))
        o_ref[0] = jnp.concatenate(outs, axis=-1) if len(outs) > 1 else outs[0]


def _flash_attention(q, k, v, *, heads, dim_head):
    """q: (B, N, H*d) bf16; k, v: (B, M, H*d) bf16 -> (B, N, H*d) bf16."""
    B, N, HD = q.shape
    M = k.shape[1]
    d = dim_head

    tq = _pick_q_tile(N)
    tk, m_pad = _kv_tiling(M)
    needs_mask = (m_pad != M)
    if needs_mask:
        pad = ((0, 0), (0, m_pad - M), (0, 0))
        k = jnp.pad(k, pad)
        v = jnp.pad(v, pad)

    G = _pick_head_group(heads, d, tq, tk)
    gd = G * d
    n_groups = heads // G
    grid = (B, n_groups, pl.cdiv(N, tq), m_pad // tk)

    kernel = functools.partial(_flash_attn_kernel, g_heads=G, d=d, tk=tk,
                               kv_len=M, needs_mask=needs_mask)
    return pl.pallas_call(
        kernel,
        out_shape=jax.ShapeDtypeStruct((B, N, HD), jnp.bfloat16),
        grid_spec=pltpu.PrefetchScalarGridSpec(
            num_scalar_prefetch=0,
            grid=grid,
            in_specs=[
                pl.BlockSpec((1, tq, gd), lambda b, g, qi, ki: (b, qi, g)),
                pl.BlockSpec((1, tk, gd), lambda b, g, qi, ki: (b, ki, g)),
                pl.BlockSpec((1, tk, gd), lambda b, g, qi, ki: (b, ki, g)),
            ],
            out_specs=pl.BlockSpec((1, tq, gd), lambda b, g, qi, ki: (b, qi, g)),
            scratch_shapes=[
                pltpu.VMEM((G, tq, 1), jnp.float32),   # running max
                pltpu.VMEM((G, tq, 1), jnp.float32),   # running sum
                pltpu.VMEM((G, tq, d), jnp.float32),   # output accumulator
            ],
        ),
        compiler_params=pltpu.CompilerParams(
            dimension_semantics=("parallel", "parallel", "parallel", "arbitrary"),
            vmem_limit_bytes=_VMEM_LIMIT),
    )(q, k, v)


# ----------------------------------------------------------------------------
# Module wrapper
# ----------------------------------------------------------------------------
class CrossAttentionPallas:
    def __init__(self, query_dim, context_dim=None, heads=8, dim_head=64,
                 dropout=0.0, key=None):
        inner_dim = dim_head * heads
        context_dim = query_dim if context_dim is None else context_dim
        self.scale = dim_head ** (-0.5)
        self.heads = heads
        self.dim_head = dim_head
        self.query_dim = query_dim
        self.context_dim = context_dim
        self.inner_dim = inner_dim
        self.dropout = dropout  # Dropout is identity in eval mode.

        if key is None:
            key = jax.random.PRNGKey(0)
        kq, kk, kv, ko, kb = jax.random.split(key, 5)
        # PyTorch Linear weight is (out, in); y = x @ W^T. We store W^T.
        std_q = 1.0 / (query_dim ** 0.5)
        std_c = 1.0 / (context_dim ** 0.5)
        std_o = 1.0 / (inner_dim ** 0.5)
        self.wq_t = jax.random.normal(kq, (query_dim, inner_dim), jnp.float32) * std_q
        self.wk_t = jax.random.normal(kk, (context_dim, inner_dim), jnp.float32) * std_c
        self.wv_t = jax.random.normal(kv, (context_dim, inner_dim), jnp.float32) * std_c
        self.wo_t = jax.random.normal(ko, (inner_dim, query_dim), jnp.float32) * std_o
        self.bo = jax.random.normal(kb, (1, query_dim), jnp.float32) * std_o

        # bf16 copies for the MXU (fp32 accumulation inside kernels). The
        # softmax scale is folded into Wq. K/V (and Q/K/V for self-attention)
        # weights are concatenated so the activations are streamed once.
        wq_scaled = self.wq_t * self.scale
        self._wq_bf = wq_scaled.astype(jnp.bfloat16)
        self._wkv_bf = jnp.concatenate([self.wk_t, self.wv_t], axis=1).astype(jnp.bfloat16)
        if context_dim == query_dim:
            self._wqkv_bf = jnp.concatenate(
                [wq_scaled, self.wk_t, self.wv_t], axis=1).astype(jnp.bfloat16)
        else:
            self._wqkv_bf = None
        self._wo_bf = self.wo_t.astype(jnp.bfloat16)

    def __call__(self, x, context=None, mask=None):
        # TODO(synk): optional user `mask` path (masked_fill -finfo.max) not wired in.
        assert mask is None, "mask not supported in this kernel"
        B, N, _ = x.shape
        H, d = self.heads, self.dim_head
        inner = self.inner_dim

        if context is None:
            # Self-attention: fused Q/K/V projection -> x streamed once.
            qkv = _tiled_linear(x.reshape(B * N, self.query_dim), self._wqkv_bf,
                                out_dtype=jnp.bfloat16)
            q = qkv[:, :inner].reshape(B, N, inner)
            k = qkv[:, inner:2 * inner].reshape(B, N, inner)
            v = qkv[:, 2 * inner:].reshape(B, N, inner)
        else:
            M = context.shape[1]
            q = _tiled_linear(x.reshape(B * N, self.query_dim), self._wq_bf,
                              out_dtype=jnp.bfloat16).reshape(B, N, inner)
            # Fused K/V projection: context streamed from HBM once.
            kvp = _tiled_linear(context.reshape(B * M, self.context_dim),
                                self._wkv_bf, out_dtype=jnp.bfloat16)
            k = kvp[:, :inner].reshape(B, M, inner)
            v = kvp[:, inner:].reshape(B, M, inner)

        # Flash attention writes its result directly in (B, N, H*d) layout.
        attn = _flash_attention(q, k, v, heads=H, dim_head=d)

        # to_out: Linear(inner_dim, query_dim) + Dropout (identity in eval).
        out = _tiled_linear(attn.reshape(B * N, inner), self._wo_bf,
                            bias=self.bo, out_dtype=jnp.float32)
        return out.reshape(B, N, self.query_dim)


# ----------------------------------------------------------------------------
# Pure-JAX fp32 reference (for correctness check)
# ----------------------------------------------------------------------------
def _reference(mod, x, context=None):
    if context is None:
        context = x
    B, N, _ = x.shape
    M = context.shape[1]
    H, d = mod.heads, mod.dim_head
    q = (x @ mod.wq_t).reshape(B, N, H, d).transpose(0, 2, 1, 3)
    k = (context @ mod.wk_t).reshape(B, M, H, d).transpose(0, 2, 1, 3)
    v = (context @ mod.wv_t).reshape(B, M, H, d).transpose(0, 2, 1, 3)
    sim = jnp.einsum('bhnd,bhmd->bhnm', q, k) * mod.scale
    attn = jax.nn.softmax(sim, axis=-1)
    out = jnp.einsum('bhnm,bhmd->bhnd', attn, v)
    out = out.transpose(0, 2, 1, 3).reshape(B, N, H * d)
    return out @ mod.wo_t + mod.bo[0]


if __name__ == "__main__":
    key = jax.random.PRNGKey(0)
    k_param, k_x, k_ctx = jax.random.split(key, 3)

    B, N, M = 2, 16, 8
    query_dim, context_dim = 32, 24
    heads, dim_head = 2, 16

    mod = CrossAttentionPallas(query_dim, context_dim=context_dim,
                               heads=heads, dim_head=dim_head, key=k_param)

    x = jax.random.normal(k_x, (B, N, query_dim), jnp.float32)
    ctx = jax.random.normal(k_ctx, (B, M, context_dim), jnp.float32)

    out = jax.block_until_ready(mod(x, ctx))   # cross-attention path

    # Self-attention path (context=None) with matching dims.
    mod_self = CrossAttentionPallas(query_dim, context_dim=None,
                                    heads=heads, dim_head=dim_head, key=k_param)
    out_self = jax.block_until_ready(mod_self(x))

    ref = _reference(mod, x, ctx)
    ref_self = _reference(mod_self, x)

    assert out.shape == (B, N, query_dim)
    assert out_self.shape == (B, N, query_dim)
    # bf16 MXU inputs with fp32 accumulation -> compare loosely vs fp32 reference.
    assert jnp.allclose(out, ref, atol=5e-2, rtol=5e-2), "cross-attn mismatch"
    assert jnp.allclose(out_self, ref_self, atol=5e-2, rtol=5e-2), "self-attn mismatch"

    print("KERNEL_OK")
</pallas_src>

<mosaic_0001>
module attributes {stable_mosaic.version = 11 : i64} {
  func.func @_linear_kernel(%arg0: i32, %arg1: memref<32x32xf32, #tpu.memory_space<vmem>>, %arg2: memref<32x32xbf16, #tpu.memory_space<vmem>>, %arg3: memref<32x32xbf16, #tpu.memory_space<vmem>>) attributes {dimension_semantics = [#tpu.dimension_semantics<parallel>], iteration_bounds = array<i64: 1>, scalar_prefetch = 0 : i64, scratch_operands = 0 : i64, tpu.core_type = #tpu.core_type<tc>, window_params = [{transform_indices = @transform_0, window_bounds = array<i64: 32, 32>}, {pipeline_mode = #tpu.pipeline_mode<synchronous>, transform_indices = @transform_1, window_bounds = array<i64: 32, 32>}, {transform_indices = @transform_2, window_bounds = array<i64: 32, 32>}]} {
    %c0 = arith.constant 0 : index
    %c0_0 = arith.constant 0 : index
    %0 = vector.load %arg1[%c0, %c0_0] : memref<32x32xf32, #tpu.memory_space<vmem>>, vector<32x32xf32>
    %1 = arith.truncf %0 : vector<32x32xf32> to vector<32x32xbf16>
    %c0_1 = arith.constant 0 : index
    %c0_2 = arith.constant 0 : index
    %2 = vector.load %arg2[%c0_1, %c0_2] : memref<32x32xbf16, #tpu.memory_space<vmem>>, vector<32x32xbf16>
    %cst = arith.constant dense<0.000000e+00> : vector<32x32xf32>
    %3 = tpu.matmul %1, %2, %cst {dimension_numbers = #tpu.dot_dimension_numbers<[1], [0], [0], [1], [0, 0, 1, 1], [], []>} : vector<32x32xbf16>, vector<32x32xbf16>, vector<32x32xf32> -> vector<32x32xf32>
    %4 = arith.truncf %3 : vector<32x32xf32> to vector<32x32xbf16>
    %c0_3 = arith.constant 0 : index
    %c0_4 = arith.constant 0 : index
    %5 = vector.load %arg3[%c0_3, %c0_4] : memref<32x32xbf16, #tpu.memory_space<vmem>>, vector<32x32xbf16>
    tpu.vector_store %arg3[%c0_3, %c0_4], %4 {strides = array<i32>} : memref<32x32xbf16, #tpu.memory_space<vmem>>, vector<32x32xbf16>,
    return
  }
  func.func @transform_0(%arg0: i32) -> (i32, i32) {
    %c0_i32 = arith.constant 0 : i32
    %c0_i32_0 = arith.constant 0 : i32
    return %arg0, %c0_i32 : i32, i32
  }
  func.func @transform_1(%arg0: i32) -> (i32, i32) {
    %c0_i32 = arith.constant 0 : i32
    %c0_i32_0 = arith.constant 0 : i32
    %c0_i32_1 = arith.constant 0 : i32
    return %c0_i32, %c0_i32_0 : i32, i32
  }
  func.func @transform_2(%arg0: i32) -> (i32, i32) {
    %c0_i32 = arith.constant 0 : i32
    %c0_i32_0 = arith.constant 0 : i32
    return %arg0, %c0_i32 : i32, i32
  }
}

</mosaic_0001>

<llo_original>
// kernel: tpu_custom_call.1
$region0: #{tpu_custom_call.1}
  #allocation0 [shape = 'u32[]', space=smem, size = 0x4, offset = 0x4, fixed_abs, tag = 'smem constant byte address 0x4 - core index']
  #allocation1 [shape = 'u32[144,128]{1,0:T(1,128)}', space=vmem, size = 0x12000, scoped, tag = 'internal scratch']
  %s0 = inlined_call_operand.hbm [shape: f32[32,32], index: 0, kind: input, shape index: {}]
  %s1 = inlined_call_operand.hbm [shape: bf16[32,32], index: 1, kind: input, shape index: {}]
  %s2 = inlined_call_operand.hbm [shape: bf16[32,32], index: 2, kind: output, shape index: {}]
  %s3 = sld [smem:[#allocation0]]
  $region26: #{tpu_custom_call.1} parent=0
    _
  %s5 = ssub.s32 1, %s3
  %s6 = scalar_select 0, %s5, %s3
  $region1: #{tpu_custom_call.1} parent=0
    #allocation2 [shape = 'u8[16384]{0}', space=vmem, size = 0x4000, scoped, tag = 'input window, operand 0, single buffered']
    #allocation3 [shape = 's32[1]{0}', space=sflag, size = 0x4, scoped, tag = 'scoped memory for tpu_custom_call.1']
    #allocation4 [shape = 's32[1]{0}', space=sflag, size = 0x4, scoped, tag = 'scoped memory for tpu_custom_call.1']
    #allocation5 [shape = 'u8[8192]{0}', space=vmem, size = 0x2000, scoped, tag = 'input window, operand 1, single buffered']
    #allocation6 [shape = 's32[1]{0}', space=sflag, size = 0x4, scoped, tag = 'scoped memory for tpu_custom_call.1']
    #allocation7 [shape = 'u8[8192]{0}', space=vmem, size = 0x2000, scoped, tag = 'output window, operand 0, single buffered']
    %7 = vsyncpa [#allocation3], 0
    %8 = vsyncpa [#allocation6], 0
    %9 = vsyncpa [#allocation4], 0
    // Predicated region
    $region2: #{tpu_custom_call.1} parent=1 // pred_check
      _
    $region3: #{tpu_custom_call.1} parent=1 // pred_check_branch
      %11 = sbr.rel (0) target = $region5
    $region4: #{tpu_custom_call.1} parent=1 // pred_region
      %s13 = ssub.s32 512, 512
      %14 = vsyncadd [#allocation3], %s13
      %s15 = sshll.u32 [#allocation2], 4
      %s16 = int_to_ptr.vmem [resolvable:$true] %s15
      %21 = dma.hbm_to_vmem [thread:$0]  %s0, 512, %s16, [#allocation3], 128, 128, 8
    $region5: #{tpu_custom_call.1} parent=1 // pred_fallthru
      _
    // Predicated region
    $region6: #{tpu_custom_call.1} parent=1 // pred_check
      _
    $region7: #{tpu_custom_call.1} parent=1 // pred_check_branch
      %23 = sbr.rel (0) target = $region9
    $region8: #{tpu_custom_call.1} parent=1 // pred_region
      %s25 = ssub.s32 256, 256
      %26 = vsyncadd [#allocation6], %s25
      %s27 = sshll.u32 [#allocation5], 4
      %s28 = int_to_ptr.vmem [resolvable:$true] %s27
      %33 = dma.hbm_to_vmem [thread:$0]  %s1, 256, %s28, [#allocation6], 64, 64, 4
    $region9: #{tpu_custom_call.1} parent=1 // pred_fallthru
      _
    // Predicated region
    $region10: #{tpu_custom_call.1} parent=1 // pred_check
      _
    $region11: #{tpu_custom_call.1} parent=1 // pred_check_branch
      %35 = sbr.rel (0) target = $region13
    $region12: #{tpu_custom_call.1} parent=1 // pred_region
      %36 = dma.done [#allocation3], 512
    $region13: #{tpu_custom_call.1} parent=1 // pred_fallthru
      _
    // Predicated region
    $region14: #{tpu_custom_call.1} parent=1 // pred_check
      _
    $region15: #{tpu_custom_call.1} parent=1 // pred_check_branch
      %38 = sbr.rel (0) target = $region17
    $region16: #{tpu_custom_call.1} parent=1 // pred_region
      %39 = dma.done [#allocation6], 256
    $region17: #{tpu_custom_call.1} parent=1 // pred_fallthru
      _
    %v41 = vld [vmem:[#allocation2] sm:$0xff]
    %v42 = vld [vmem:[#allocation2 + $0x8] sm:$0xff]
    %v43 = vld [vmem:[#allocation2 + $0x10] sm:$0xff]
    %v44 = vld [vmem:[#allocation2 + $0x18] sm:$0xff]
    %v45 = vpack.c.bf16 %v42, %v41
    %v46 = vpack.c.bf16 %v44, %v43
    %v47 = vld [vmem:[#allocation5] sm:$0xf]
    %v48 = vld [vmem:[#allocation5 + $0x4] sm:$0xf]
    %v49 = vld [vmem:[#allocation5 + $0x8] sm:$0xf]
    %v50 = vld [vmem:[#allocation5 + $0xc] sm:$0xf]
    %v55 = vunpack.c.l.b16 %v47
    %v56 = vunpack.c.l.b16 %v48
    %v57 = vunpack.c.l.b16 %v49
    %v58 = vunpack.c.l.b16 %v50
    %v59 = vpack.c.b16 %v56, %v55
    %v60 = vpack.c.b16 %v58, %v57
    %vm63 = vcmask 261120
    %v65 = vsel %vm63, %v45, 0
    %v68 = vsel %vm63, %v46, 0
    %70 = vmatprep.subr.bf16.mxu0 0
    %71 = vmatpush1.bf16.msra.mxu0 0
    %72 = vmatprep.subr.bf16.mxu0 0
    %73 = vmatpush1.bf16.msra.mxu0 0
    %74 = vmatprep.subr.bf16.mxu0 0
    %75 = vmatpush1.bf16.msra.mxu0 0
    %76 = vmatprep.subr.bf16.mxu0 0
    %77 = vmatpush1.bf16.msra.mxu0 0
    %78 = vmatprep.subr.bf16.mxu0 0
    %79 = vmatpush1.bf16.msra.mxu0 0
    %80 = vmatprep.subr.bf16.mxu0 0
    %81 = vmatpush1.bf16.msra.mxu0 0
    %82 = vmatprep.subr.bf16.mxu0 0
    %83 = vmatpush1.bf16.msra.mxu0 %v60
    %84 = vmatprep.subr.bf16.mxu0 0
    %85 = vmatpush1.bf16.msra.mxu0 %v59
    %86 = vmatprep.subr.bf16.mxu0 0
    %87 = vmatpush2.bf16.msra.mxu0 0
    %88 = vmatprep.subr.bf16.mxu0 0
    %89 = vmatpush2.bf16.msra.mxu0 0
    %90 = vmatprep.subr.bf16.mxu0 0
    %91 = vmatpush2.bf16.msra.mxu0 0
    %92 = vmatprep.subr.bf16.mxu0 0
    %93 = vmatpush2.bf16.msra.mxu0 0
    %94 = vmatprep.subr.bf16.mxu0 0
    %95 = vmatpush2.bf16.msra.mxu0 0
    %96 = vmatprep.subr.bf16.mxu0 0
    %97 = vmatpush2.bf16.msra.mxu0 0
    %98 = vmatprep.subr.bf16.mxu0 0
    %99 = vmatpush2.bf16.msra.mxu0 0
    %100 = vmatprep.subr.bf16.mxu0 0
    %101 = vmatpush2.bf16.msra.mxu0 0
    %102 = vmatprep.mubr.bf16.mxu0 0
    %103 = vmatmul.mubr.bf16.gmra.mxu0 %v65
    %v104 = vpop.f32.mrf.mxu0
    %v105 = vadd.f32 0.0, %v104
    %v106 = vpop.f32.mrf.mxu0
    %v107 = vpop.f32.mrf.mxu0
    %v108 = vadd.f32 0.0, %v107
    %v109 = vpop.f32.mrf.mxu0
    %110 = vmatprep.mubr.bf16.mxu0 0
    %111 = vmatmul.mubr.bf16.gmra.mxu0 %v68
    %v112 = vpop.f32.mrf.mxu0
    %v113 = vadd.f32 0.0, %v112
    %v114 = vpop.f32.mrf.mxu0
    %v115 = vpop.f32.mrf.mxu0
    %v116 = vadd.f32 0.0, %v115
    %v117 = vpop.f32.mrf.mxu0
    %118 = vdwg.mxu0
    %v119 = vpack.c.bf16 %v108, %v105
    %v120 = vpack.c.bf16 %v116, %v113
    %v123 = vunpack.c.l.b16 %v119
    %v124 = vunpack.c.h.b16 %v119
    %v125 = vunpack.c.l.b16 %v120
    %v126 = vunpack.c.h.b16 %v120
    %v127 = vpack.c.b16 %v123, %v123
    %v128 = vpack.c.b16 %v124, %v124
    %v129 = vpack.c.b16 %v125, %v125
    %v130 = vpack.c.b16 %v126, %v126
    %vm135 = vcmask 257024
    %136 = vst.msk [vmem:[#allocation7] sm:$0xf] %vm135, %v127
    %137 = vst.msk [vmem:[#allocation7 + $0x4] sm:$0xf] %vm135, %v128
    %138 = vst.msk [vmem:[#allocation7 + $0x8] sm:$0xf] %vm135, %v129
    %139 = vst.msk [vmem:[#allocation7 + $0xc] sm:$0xf] %vm135, %v130
    // Predicated region
    $region18: #{tpu_custom_call.1} parent=1 // pred_check
      _
    $region19: #{tpu_custom_call.1} parent=1 // pred_check_branch
      %141 = sbr.rel (0) target = $region21
    $region20: #{tpu_custom_call.1} parent=1 // pred_region
      %s143 = ssub.s32 256, 256
      %144 = vsyncadd [#allocation4], %s143
      %s145 = sshll.u32 [#allocation7], 4
      %s146 = int_to_ptr.vmem [resolvable:$true] %s145
      %151 = dma.vmem_to_hbm [thread:$0]  %s146, 256, %s2, [#allocation4], 64, 64, 4
    $region21: #{tpu_custom_call.1} parent=1 // pred_fallthru
      _
    // Predicated region
    $region22: #{tpu_custom_call.1} parent=1 // pred_check
      _
    $region23: #{tpu_custom_call.1} parent=1 // pred_check_branch
      %153 = sbr.rel (0) target = $region25
    $region24: #{tpu_custom_call.1} parent=1 // pred_region
      %154 = dma.done [#allocation4], 256
    $region25: #{tpu_custom_call.1} parent=1 // pred_fallthru
      _
    %155 = vsyncpa [#allocation3], 1
    %156 = vsyncpa [#allocation6], 1
    %157 = vsyncpa [#allocation4], 1

</llo_original>
